<compile_context>
chip_gen: v6e
topology: v6e:2x2x1
jax: 0.10.0
libtpu: 0.0.40
codegen_flags: <defaults>
</compile_context>

<pallas_src>
import math

import jax
import jax.numpy as jnp
from jax.experimental import pallas as pl
from jax.experimental.pallas import tpu as pltpu

_LANE = 128
_DEFAULT_FOOTPRINT_BUDGET = 24 * 1024 * 1024  # total double-buffered bytes per step


def _pe_add_kernel(x_ref, pe_ref, o_ref):
    # x_ref : (TB, TR, 128) input tile
    # pe_ref: (1,  TR, 128) positional-encoding tile (broadcast over batch)
    # o_ref : (TB, TR, 128) output tile
    o_ref[...] = (x_ref[...].astype(jnp.float32) + pe_ref[...]).astype(o_ref.dtype)


def make_positional_encoding_table(d_model: int, max_len: int = 5000) -> jnp.ndarray:
    """Sinusoidal PE table identical to the PyTorch `pe` buffer (float32)."""
    position = jnp.arange(max_len, dtype=jnp.float32)[:, None]               # [L, 1]
    div_term = jnp.exp(
        jnp.arange(0, d_model, 2, dtype=jnp.float32) * (-math.log(10000.0) / d_model)
    )                                                                         # [ceil(D/2)]
    angles = position * div_term                                              # [L, ceil(D/2)]
    pe = jnp.zeros((max_len, d_model), dtype=jnp.float32)
    pe = pe.at[:, 0::2].set(jnp.sin(angles))
    pe = pe.at[:, 1::2].set(jnp.cos(angles[:, : d_model // 2]))
    return pe


def _round_up(x: int, m: int) -> int:
    return ((x + m - 1) // m) * m


def _cdiv(a: int, b: int) -> int:
    return -(-a // b)


def _choose_tiles(B, R, x_itemsize, out_itemsize, budget_bytes):
    """Pick (TB, TR): batch-tile and row-tile sizes.

    The budget is the *total* double-buffered VMEM footprint per grid step:
        2 * (TB*TR*128*x_item  +  TB*TR*128*out_item  +  TR*128*4)
    """
    per_br = 2 * _LANE * (x_itemsize + out_itemsize)   # x + out, double-buffered
    per_row_pe = 2 * _LANE * 4                         # f32 PE, double-buffered

    def max_rows(tb):
        per_row = tb * per_br + per_row_pe
        return max(1, budget_bytes // per_row)

    # Prefer the whole batch inside each block (PE amortizes best); only tile
    # the batch when even an 8-row block with full batch would blow the budget.
    TB = B
    min_rows = min(R, 8)
    if B > 1 and max_rows(B) < min_rows:
        TB = max(1, int((budget_bytes // min_rows - per_row_pe) // per_br))
        TB = min(TB, B)

    if R <= 8:
        # Full row extent in one block (block dim == array dim is always legal).
        return TB, R

    TR = min(R, max_rows(TB))
    TR = max(8, (TR // 8) * 8)                         # lane-dense sublane multiple

    # Megacore: make sure the grid has at least 2 row tiles when R allows it,
    # so both v7x TensorCores get work (free on single-TC v5e/v6e).
    if TR >= R and R >= 16:
        TR = max(8, _round_up(_cdiv(R, 2), 8))

    # Prefer an even number of row tiles so the two TCs get equal shares.
    nt = _cdiv(R, TR)
    if nt > 1 and nt % 2 == 1:
        candidates = [nt + 1] + ([nt - 1] if nt - 1 >= 2 else [])
        for cand_nt in candidates:
            cand_tr = _round_up(_cdiv(R, cand_nt), 8)
            if cand_tr >= 8 and _cdiv(R, cand_tr) % 2 == 0:
                TR = cand_tr
                break

    return TB, TR


def positional_encoding_forward(
    x: jnp.ndarray,
    pe_table: jnp.ndarray,
    *,
    out_dtype=None,
    footprint_budget_bytes: int = _DEFAULT_FOOTPRINT_BUDGET,
) -> jnp.ndarray:
    """x: [B, S, D]. Returns float32(x) + pe[:S].

    out_dtype defaults to float32 (matches PyTorch's `x.float() + pe`); pass
    e.g. jnp.bfloat16 to cut HBM writeback traffic when downstream allows it.
    """
    B, S, D = x.shape
    if out_dtype is None:
        out_dtype = jnp.float32
    pe_slice = pe_table[:S, :].astype(jnp.float32)                 # [S, D]

    # Lane-dense view: flatten (S, D) into rows of 128 lanes. If S*D is not a
    # multiple of 128, pad D up to a multiple of 128 in the wrapper so kernel
    # stores stay full unmasked (8,128) vregs; the pad is sliced off afterwards.
    D_pad = D
    if (S * D) % _LANE != 0:
        D_pad = _round_up(D, _LANE)
        x = jnp.pad(x, ((0, 0), (0, 0), (0, D_pad - D)))
        pe_slice = jnp.pad(pe_slice, ((0, 0), (0, D_pad - D)))
    R = (S * D_pad) // _LANE
    x_v = x.reshape(B, R, _LANE)
    pe_v = pe_slice.reshape(1, R, _LANE)

    x_item = jnp.dtype(x_v.dtype).itemsize
    out_item = jnp.dtype(out_dtype).itemsize
    TB, TR = _choose_tiles(B, R, x_item, out_item, footprint_budget_bytes)

    num_row_tiles = pl.cdiv(R, TR)
    num_batch_tiles = pl.cdiv(B, TB)

    # Real double-buffered footprint of the chosen tiles -> explicit VMEM limit
    # (needed above v5e's 16 MiB scoped default; kept well under v7x's 64 MiB).
    footprint = 2 * (TB * TR * _LANE * x_item
                     + TB * TR * _LANE * out_item
                     + TR * _LANE * 4)
    vmem_limit = int(min(56 * 1024 * 1024,
                         max(footprint + 8 * 1024 * 1024, 24 * 1024 * 1024)))

    out = pl.pallas_call(
        _pe_add_kernel,
        out_shape=jax.ShapeDtypeStruct((B, R, _LANE), out_dtype),
        grid_spec=pltpu.PrefetchScalarGridSpec(
            num_scalar_prefetch=0,
            # Batch axis last (fastest): PE block index is unchanged across
            # consecutive batch steps, so the shared PE tile is not re-DMA'd.
            grid=(num_row_tiles, num_batch_tiles),
            in_specs=[
                pl.BlockSpec((TB, TR, _LANE), lambda t, b: (b, t, 0)),   # x tile
                pl.BlockSpec((1, TR, _LANE), lambda t, b: (0, t, 0)),    # PE tile
            ],
            out_specs=pl.BlockSpec((TB, TR, _LANE), lambda t, b: (b, t, 0)),
        ),
        compiler_params=pltpu.CompilerParams(
            dimension_semantics=("parallel", "parallel"),   # megacore-shardable
            vmem_limit_bytes=vmem_limit,
        ),
    )(x_v, pe_v)

    out = out.reshape(B, S, D_pad)
    if D_pad != D:
        out = out[:, :, :D]
    return out


if __name__ == "__main__":
    key = jax.random.PRNGKey(0)

    # Small shapes consistent with the module: batch=2, seq=8, d_model=32.
    B, S, D = 2, 8, 32
    MAX_LEN = 64
    x = jax.random.normal(key, (B, S, D), dtype=jnp.float32)
    pe_table = make_positional_encoding_table(D, MAX_LEN)

    out = positional_encoding_forward(x, pe_table)
    out = jax.block_until_ready(out)

    ref = x.astype(jnp.float32) + pe_table[:S, :][None, :, :]
    assert out.shape == (B, S, D)
    assert out.dtype == jnp.float32
    assert jnp.allclose(out, ref, atol=1e-6, rtol=1e-6)

    # Second small case exercising the lane-padding path (S*D % 128 != 0).
    B2, S2, D2 = 2, 7, 48
    x2 = jax.random.normal(jax.random.PRNGKey(1), (B2, S2, D2), dtype=jnp.bfloat16)
    pe_table2 = make_positional_encoding_table(D2, MAX_LEN)
    out2 = jax.block_until_ready(positional_encoding_forward(x2, pe_table2))
    ref2 = x2.astype(jnp.float32) + pe_table2[:S2, :][None, :, :]
    assert out2.shape == (B2, S2, D2)
    assert out2.dtype == jnp.float32
    assert jnp.allclose(out2, ref2, atol=1e-5, rtol=1e-5)

    print("KERNEL_OK")
</pallas_src>

<mosaic_0001>
module attributes {stable_mosaic.version = 11 : i64} {
  func.func @_pe_add_kernel(%arg0: i32, %arg1: i32, %arg2: memref<2x2x128xf32, #tpu.memory_space<vmem>>, %arg3: memref<1x2x128xf32, #tpu.memory_space<vmem>>, %arg4: memref<2x2x128xf32, #tpu.memory_space<vmem>>) attributes {dimension_semantics = [#tpu.dimension_semantics<parallel>, #tpu.dimension_semantics<parallel>], iteration_bounds = array<i64: 1, 1>, scalar_prefetch = 0 : i64, scratch_operands = 0 : i64, tpu.core_type = #tpu.core_type<tc>, window_params = [{transform_indices = @transform_0, window_bounds = array<i64: 2, 2, 128>}, {transform_indices = @transform_1, window_bounds = array<i64: 1, 2, 128>}, {transform_indices = @transform_2, window_bounds = array<i64: 2, 2, 128>}]} {
    %c0 = arith.constant 0 : index
    %c0_0 = arith.constant 0 : index
    %c0_1 = arith.constant 0 : index
    %0 = vector.load %arg2[%c0, %c0_0, %c0_1] : memref<2x2x128xf32, #tpu.memory_space<vmem>>, vector<2x2x128xf32>
    %c0_2 = arith.constant 0 : index
    %c0_3 = arith.constant 0 : index
    %c0_4 = arith.constant 0 : index
    %1 = vector.load %arg3[%c0_2, %c0_3, %c0_4] : memref<1x2x128xf32, #tpu.memory_space<vmem>>, vector<1x2x128xf32>
    %2 = vector.broadcast %1 : vector<1x2x128xf32> to vector<2x2x128xf32>
    %3 = arith.addf %0, %2 : vector<2x2x128xf32>
    %c0_5 = arith.constant 0 : index
    %c0_6 = arith.constant 0 : index
    %c0_7 = arith.constant 0 : index
    %4 = vector.load %arg4[%c0_5, %c0_6, %c0_7] : memref<2x2x128xf32, #tpu.memory_space<vmem>>, vector<2x2x128xf32>
    tpu.vector_store %arg4[%c0_5, %c0_6, %c0_7], %3 {strides = array<i32>} : memref<2x2x128xf32, #tpu.memory_space<vmem>>, vector<2x2x128xf32>,
    return
  }
  func.func @transform_0(%arg0: i32, %arg1: i32) -> (i32, i32, i32) {
    %c0_i32 = arith.constant 0 : i32
    %c0_i32_0 = arith.constant 0 : i32
    return %arg1, %arg0, %c0_i32 : i32, i32, i32
  }
  func.func @transform_1(%arg0: i32, %arg1: i32) -> (i32, i32, i32) {
    %c0_i32 = arith.constant 0 : i32
    %c0_i32_0 = arith.constant 0 : i32
    %c0_i32_1 = arith.constant 0 : i32
    return %c0_i32, %arg0, %c0_i32_0 : i32, i32, i32
  }
  func.func @transform_2(%arg0: i32, %arg1: i32) -> (i32, i32, i32) {
    %c0_i32 = arith.constant 0 : i32
    %c0_i32_0 = arith.constant 0 : i32
    return %arg1, %arg0, %c0_i32 : i32, i32, i32
  }
}

</mosaic_0001>

<llo_original>
// kernel: tpu_custom_call.1
$region0: #{tpu_custom_call.1}
  #allocation0 [shape = 'u32[]', space=smem, size = 0x4, offset = 0x4, fixed_abs, tag = 'smem constant byte address 0x4 - core index']
  #allocation1 [shape = 'u32[144,128]{1,0:T(1,128)}', space=vmem, size = 0x12000, scoped, tag = 'internal scratch']
  %s0 = inlined_call_operand.hbm [shape: f32[2,2,128], index: 0, kind: input, shape index: {}]
  %s1 = inlined_call_operand.hbm [shape: f32[1,2,128], index: 1, kind: input, shape index: {}]
  %s2 = inlined_call_operand.hbm [shape: f32[2,2,128], index: 2, kind: output, shape index: {}]
  %s3 = sld [smem:[#allocation0]]
  $region26: #{tpu_custom_call.1} parent=0
    _
  %s5 = ssub.s32 1, %s3
  %s6 = scalar_select 0, %s5, %s3
  $region1: #{tpu_custom_call.1} parent=0
    #allocation2 [shape = 'u8[2048]{0}', space=vmem, size = 0x800, scoped, tag = 'input window, operand 0, single buffered']
    #allocation3 [shape = 's32[1]{0}', space=sflag, size = 0x4, scoped, tag = 'scoped memory for tpu_custom_call.1']
    #allocation4 [shape = 's32[1]{0}', space=sflag, size = 0x4, scoped, tag = 'scoped memory for tpu_custom_call.1']
    #allocation5 [shape = 'u8[1024]{0}', space=vmem, size = 0x400, scoped, tag = 'input window, operand 1, single buffered']
    #allocation6 [shape = 's32[1]{0}', space=sflag, size = 0x4, scoped, tag = 'scoped memory for tpu_custom_call.1']
    #allocation7 [shape = 'u8[2048]{0}', space=vmem, size = 0x800, scoped, tag = 'output window, operand 0, single buffered']
    %7 = vsyncpa [#allocation3], 0
    %8 = vsyncpa [#allocation6], 0
    %9 = vsyncpa [#allocation4], 0
    // Predicated region
    $region2: #{tpu_custom_call.1} parent=1 // pred_check
      _
    $region3: #{tpu_custom_call.1} parent=1 // pred_check_branch
      %11 = sbr.rel (0) target = $region5
    $region4: #{tpu_custom_call.1} parent=1 // pred_region
      %s13 = ssub.s32 64, 64
      %14 = vsyncadd [#allocation3], %s13
      %s15 = sshll.u32 [#allocation2], 4
      %s16 = int_to_ptr.vmem [resolvable:$true] %s15
      %21 = dma.hbm_to_vmem [thread:$0]  %s0, 64, %s16, [#allocation3], 32, 32, 2
    $region5: #{tpu_custom_call.1} parent=1 // pred_fallthru
      _
    // Predicated region
    $region6: #{tpu_custom_call.1} parent=1 // pred_check
      _
    $region7: #{tpu_custom_call.1} parent=1 // pred_check_branch
      %23 = sbr.rel (0) target = $region9
    $region8: #{tpu_custom_call.1} parent=1 // pred_region
      %s25 = ssub.s32 32, 32
      %26 = vsyncadd [#allocation6], %s25
      %s28 = sshll.u32 [#allocation5], 4
      %s29 = int_to_ptr.vmem [resolvable:$true] %s28
      %31 = dma.hbm_to_vmem [thread:$0]  %s1, 32, %s29, [#allocation6]
    $region9: #{tpu_custom_call.1} parent=1 // pred_fallthru
      _
    // Predicated region
    $region10: #{tpu_custom_call.1} parent=1 // pred_check
      _
    $region11: #{tpu_custom_call.1} parent=1 // pred_check_branch
      %33 = sbr.rel (0) target = $region13
    $region12: #{tpu_custom_call.1} parent=1 // pred_region
      %34 = dma.done [#allocation3], 64
    $region13: #{tpu_custom_call.1} parent=1 // pred_fallthru
      _
    // Predicated region
    $region14: #{tpu_custom_call.1} parent=1 // pred_check
      _
    $region15: #{tpu_custom_call.1} parent=1 // pred_check_branch
      %36 = sbr.rel (0) target = $region17
    $region16: #{tpu_custom_call.1} parent=1 // pred_region
      %37 = dma.done [#allocation6], 32
    $region17: #{tpu_custom_call.1} parent=1 // pred_fallthru
      _
    %v38 = vld [vmem:[#allocation2] sm:$0x3]
    %v39 = vld [vmem:[#allocation2 + $0x2] sm:$0x3]
    %v40 = vld [vmem:[#allocation5] sm:$0x3]
    %v41 = vadd.f32 %v38, %v40
    %v42 = vadd.f32 %v39, %v40
    %43 = vst [vmem:[#allocation7] sm:$0x3] %v41
    %44 = vst [vmem:[#allocation7 + $0x2] sm:$0x3] %v42
    // Predicated region
    $region18: #{tpu_custom_call.1} parent=1 // pred_check
      _
    $region19: #{tpu_custom_call.1} parent=1 // pred_check_branch
      %46 = sbr.rel (0) target = $region21
    $region20: #{tpu_custom_call.1} parent=1 // pred_region
      %s48 = ssub.s32 64, 64
      %49 = vsyncadd [#allocation4], %s48
      %s50 = sshll.u32 [#allocation7], 4
      %s51 = int_to_ptr.vmem [resolvable:$true] %s50
      %56 = dma.vmem_to_hbm [thread:$0]  %s51, 64, %s2, [#allocation4], 32, 32, 2
    $region21: #{tpu_custom_call.1} parent=1 // pred_fallthru
      _
    // Predicated region
    $region22: #{tpu_custom_call.1} parent=1 // pred_check
      _
    $region23: #{tpu_custom_call.1} parent=1 // pred_check_branch
      %58 = sbr.rel (0) target = $region25
    $region24: #{tpu_custom_call.1} parent=1 // pred_region
      %59 = dma.done [#allocation4], 64
    $region25: #{tpu_custom_call.1} parent=1 // pred_fallthru
      _
    %60 = vsyncpa [#allocation3], 1
    %61 = vsyncpa [#allocation6], 1
    %62 = vsyncpa [#allocation4], 1

</llo_original>
